<compile_context>
chip_gen: v5e
topology: v5e:2x2
jax: 0.10.0
libtpu: 0.0.40
codegen_flags: <defaults>
</compile_context>

<pallas_src>
import numpy as np
import jax
import jax.numpy as jnp
from jax import lax
from jax.experimental import pallas as pl
from jax.experimental.pallas import tpu as pltpu


def attn_block_forward(x, params):
    """Pallas forward of Attn_Block (eval-mode BN folded into conv weights)."""
    N, C, H, W = x.shape
    HW = H * W
    Cmid = C // 2
    Cr = C // 16          # SEAttention uses its default reduction=16
    dil = 4
    eps = 1e-5
    f32 = jnp.float32

    # ---- fold conv bias + eval-mode BN: scale goes into the weights, bias stays ----
    def fold(gamma, beta, mean, var, conv_bias):
        scale = (gamma / jnp.sqrt(var + eps)).astype(f32)
        bias = (beta + scale * (conv_bias - mean)).astype(f32)
        return scale, bias.reshape(-1, 1)

    s1, b1 = fold(params["g1"], params["be1"], params["m1"], params["v1"], params["cb1"])
    s2, b2 = fold(params["g2"], params["be2"], params["m2"], params["v2"], params["cb2"])
    s3, b3 = fold(params["g3"], params["be3"], params["m3"], params["v3"], params["cb3"])

    w1f = (s1[:, None] * params["w1"]).astype(f32)                         # (Cmid, C)
    # conv2 taps ordered t = kh*3 + kw, flattened so conv2 is a single matmul.
    w2_flat = jnp.transpose(params["w2"], (0, 2, 3, 1)).reshape(Cmid, 9 * Cmid)
    w2f = (s2[:, None] * w2_flat).astype(f32)                              # (Cmid, 9*Cmid)
    w3f = (s3[:, None] * params["w3"]).astype(f32)                         # (C, Cmid)

    wfc1_t = params["wfc1"].T.astype(f32)                                  # (C, Cr)
    wfc2 = params["wfc2"].astype(f32)                                      # (C, Cr)

    # ---- per-tap zero-padding masks (9, 1, HW): ~9 KiB, replaces the old O(HW^2) G ----
    mask_np = np.zeros((9, 1, HW), np.float32)
    t = 0
    for dh in (-1, 0, 1):
        for dw in (-1, 0, 1):
            for y in range(H):
                if not (0 <= y + dh * dil < H):
                    continue
                for xx in range(W):
                    if 0 <= xx + dw * dil < W:
                        mask_np[t, 0, y * W + xx] = 1.0
            t += 1
    masks = jnp.asarray(mask_np)

    def kernel(x_ref, wfc1t_ref, wfc2_ref, w1_ref, b1_ref,
               w2_ref, mask_ref, b2_ref, w3_ref, b3_ref, o_ref):
        xi = x_ref[0].astype(f32)                                   # (C, HW) lane-dense

        # ---- SEAttention on VPU/XLU (no degenerate 1-column MXU matmuls) ----
        pooled = jnp.mean(xi, axis=1, keepdims=True)                # (C, 1)
        a = jnp.sum(wfc1t_ref[...] * pooled, axis=0, keepdims=True)  # (1, Cr)
        a = jnp.maximum(a, 0.0)
        ch = jnp.sum(wfc2_ref[...] * a, axis=1, keepdims=True)       # (C, 1)
        ch_attn = jnp.clip(ch + 3.0, 0.0, 6.0) * (1.0 / 3.0)        # module's relu6(x+3)/3

        # ---- Vox_Att ----
        # conv1 (1x1, BN scale folded into weight) + bias + ReLU
        h = jnp.dot(w1_ref[...], xi, preferred_element_type=f32)    # (Cmid, HW)
        h = jnp.maximum(h + b1_ref[...], 0.0)

        # conv2: 3x3 dilated(4) conv = 9 XLU rolls + padding masks, stacked into one
        # (Cmid, 9*Cmid) @ (9*Cmid, HW) MXU matmul.  For tap (dh,dw) we need
        # out[p] = h[p + s] with s = dh*dil*W + dw*dil (mask kills padded positions,
        # including wrap-around), i.e. roll(h, -s) in jnp.roll convention.
        taps = []
        ti = 0
        for dh in (-1, 0, 1):
            for dw in (-1, 0, 1):
                s = dh * dil * W + dw * dil
                r = (-s) % HW
                hr = h if r == 0 else pltpu.roll(h, r, axis=1)
                if dh == 0 and dw == 0:
                    taps.append(hr)                                  # center tap: mask == 1
                else:
                    taps.append(hr * mask_ref[ti])
                ti += 1
        stacked = jnp.concatenate(taps, axis=0)                      # (9*Cmid, HW)
        h = jnp.dot(w2_ref[...], stacked, preferred_element_type=f32)  # (Cmid, HW)
        h = jnp.maximum(h + b2_ref[...], 0.0)

        # conv3 (1x1) + bias + ReLU + Hsigmoid
        h = jnp.dot(w3_ref[...], h, preferred_element_type=f32)     # (C, HW)
        h = jnp.maximum(h + b3_ref[...], 0.0)
        vox = jnp.clip(h + 3.0, 0.0, 6.0) * (1.0 / 3.0)

        o_ref[0] = (xi * ch_attn * vox).astype(o_ref.dtype)

    xb = x.reshape(N, C, HW)
    const2 = lambda b: (0, 0)
    const3 = lambda b: (0, 0, 0)

    out = pl.pallas_call(
        kernel,
        out_shape=jax.ShapeDtypeStruct((N, C, HW), x.dtype),
        grid_spec=pltpu.PrefetchScalarGridSpec(
            num_scalar_prefetch=0,
            grid=(N,),
            in_specs=[
                pl.BlockSpec((1, C, HW), lambda b: (b, 0, 0)),   # x slab
                pl.BlockSpec((C, Cr), const2),                   # SE fc1 (pre-transposed)
                pl.BlockSpec((C, Cr), const2),                   # SE fc2
                pl.BlockSpec((Cmid, C), const2),                 # conv1 weight (BN folded)
                pl.BlockSpec((Cmid, 1), const2),                 # conv1/BN bias
                pl.BlockSpec((Cmid, 9 * Cmid), const2),          # conv2 taps (BN folded)
                pl.BlockSpec((9, 1, HW), const3),                # tap padding masks
                pl.BlockSpec((Cmid, 1), const2),                 # conv2/BN bias
                pl.BlockSpec((C, Cmid), const2),                 # conv3 weight (BN folded)
                pl.BlockSpec((C, 1), const2),                    # conv3/BN bias
            ],
            out_specs=pl.BlockSpec((1, C, HW), lambda b: (b, 0, 0)),
        ),
        compiler_params=pltpu.CompilerParams(dimension_semantics=("parallel",)),
    )(xb, wfc1_t, wfc2, w1f, b1, w2f, masks, b2, w3f, b3)

    return out.reshape(N, C, H, W)


def ref_attn_block(x, p):
    """Plain-JAX reference mirroring the PyTorch module (eval-mode BN)."""
    eps = 1e-5

    def bn(h, gamma, beta, mean, var):
        return (gamma[None, :, None, None] * (h - mean[None, :, None, None])
                / jnp.sqrt(var[None, :, None, None] + eps)
                + beta[None, :, None, None])

    # SEAttention
    pooled = jnp.mean(x, axis=(2, 3))                              # (N, C)
    a = jnp.maximum(pooled @ p["wfc1"].T, 0.0)
    a = a @ p["wfc2"].T
    ch = (jnp.clip(a + 3.0, 0.0, 6.0) / 3.0)[:, :, None, None]

    # Vox_Att
    h = jnp.einsum("nchw,oc->nohw", x, p["w1"]) + p["cb1"][None, :, None, None]
    h = jnp.maximum(bn(h, p["g1"], p["be1"], p["m1"], p["v1"]), 0.0)
    h = lax.conv_general_dilated(
        h, p["w2"], window_strides=(1, 1), padding=((4, 4), (4, 4)),
        rhs_dilation=(4, 4), dimension_numbers=("NCHW", "OIHW", "NCHW"))
    h = h + p["cb2"][None, :, None, None]
    h = jnp.maximum(bn(h, p["g2"], p["be2"], p["m2"], p["v2"]), 0.0)
    h = jnp.einsum("nchw,oc->nohw", h, p["w3"]) + p["cb3"][None, :, None, None]
    h = jnp.maximum(bn(h, p["g3"], p["be3"], p["m3"], p["v3"]), 0.0)
    vox = jnp.clip(h + 3.0, 0.0, 6.0) / 3.0

    return x * ch * vox


if __name__ == "__main__":
    N, C, H, W = 2, 32, 16, 16
    Cmid, Cr = C // 2, C // 16

    key = jax.random.PRNGKey(0)
    kx, *kp = jax.random.split(key, 24)
    kp = iter(kp)

    def nrm(shape, scale=1.0):
        return scale * jax.random.normal(next(kp), shape, dtype=jnp.float32)

    def bn_params(ch):
        return dict(
            gamma=1.0 + 0.1 * jax.random.normal(next(kp), (ch,), dtype=jnp.float32),
            beta=0.1 * jax.random.normal(next(kp), (ch,), dtype=jnp.float32),
            mean=0.1 * jax.random.normal(next(kp), (ch,), dtype=jnp.float32),
            var=jax.random.uniform(next(kp), (ch,), minval=0.5, maxval=1.5,
                                   dtype=jnp.float32),
        )

    bn1, bn2, bn3 = bn_params(Cmid), bn_params(Cmid), bn_params(C)
    params = dict(
        wfc1=nrm((Cr, C), 1.0 / np.sqrt(C)),
        wfc2=nrm((C, Cr), 1.0 / np.sqrt(Cr)),
        w1=nrm((Cmid, C), 1.0 / np.sqrt(C)), cb1=nrm((Cmid,), 0.1),
        g1=bn1["gamma"], be1=bn1["beta"], m1=bn1["mean"], v1=bn1["var"],
        w2=nrm((Cmid, Cmid, 3, 3), 1.0 / np.sqrt(Cmid * 9)), cb2=nrm((Cmid,), 0.1),
        g2=bn2["gamma"], be2=bn2["beta"], m2=bn2["mean"], v2=bn2["var"],
        w3=nrm((C, Cmid), 1.0 / np.sqrt(Cmid)), cb3=nrm((C,), 0.1),
        g3=bn3["gamma"], be3=bn3["beta"], m3=bn3["mean"], v3=bn3["var"],
    )

    x = jax.random.normal(kx, (N, C, H, W), dtype=jnp.float32)

    out = attn_block_forward(x, params)
    out = jax.block_until_ready(out)

    ref = ref_attn_block(x, params)

    assert out.shape == (N, C, H, W), out.shape
    assert out.dtype == jnp.float32, out.dtype
    assert np.allclose(np.asarray(out), np.asarray(ref), atol=1e-4, rtol=1e-4), \
        float(np.max(np.abs(np.asarray(out) - np.asarray(ref))))
    print("KERNEL_OK")
</pallas_src>

<mosaic_0001>
module attributes {stable_mosaic.version = 11 : i64} {
  func.func @kernel(%arg0: i32, %arg1: memref<1x32x256xf32, #tpu.memory_space<vmem>>, %arg2: memref<32x2xf32, #tpu.memory_space<vmem>>, %arg3: memref<32x2xf32, #tpu.memory_space<vmem>>, %arg4: memref<16x32xf32, #tpu.memory_space<vmem>>, %arg5: memref<16x1xf32, #tpu.memory_space<vmem>>, %arg6: memref<16x144xf32, #tpu.memory_space<vmem>>, %arg7: memref<9x1x256xf32, #tpu.memory_space<vmem>>, %arg8: memref<16x1xf32, #tpu.memory_space<vmem>>, %arg9: memref<32x16xf32, #tpu.memory_space<vmem>>, %arg10: memref<32x1xf32, #tpu.memory_space<vmem>>, %arg11: memref<1x32x256xf32, #tpu.memory_space<vmem>>) attributes {dimension_semantics = [#tpu.dimension_semantics<parallel>], iteration_bounds = array<i64: 2>, scalar_prefetch = 0 : i64, scratch_operands = 0 : i64, tpu.core_type = #tpu.core_type<tc>, window_params = [{transform_indices = @transform_0, window_bounds = array<i64: 1, 32, 256>}, {pipeline_mode = #tpu.pipeline_mode<synchronous>, transform_indices = @transform_1, window_bounds = array<i64: 32, 2>}, {pipeline_mode = #tpu.pipeline_mode<synchronous>, transform_indices = @transform_2, window_bounds = array<i64: 32, 2>}, {pipeline_mode = #tpu.pipeline_mode<synchronous>, transform_indices = @transform_3, window_bounds = array<i64: 16, 32>}, {pipeline_mode = #tpu.pipeline_mode<synchronous>, transform_indices = @transform_4, window_bounds = array<i64: 16, 1>}, {pipeline_mode = #tpu.pipeline_mode<synchronous>, transform_indices = @transform_5, window_bounds = array<i64: 16, 144>}, {pipeline_mode = #tpu.pipeline_mode<synchronous>, transform_indices = @transform_6, window_bounds = array<i64: 9, 1, 256>}, {pipeline_mode = #tpu.pipeline_mode<synchronous>, transform_indices = @transform_7, window_bounds = array<i64: 16, 1>}, {pipeline_mode = #tpu.pipeline_mode<synchronous>, transform_indices = @transform_8, window_bounds = array<i64: 32, 16>}, {pipeline_mode = #tpu.pipeline_mode<synchronous>, transform_indices = @transform_9, window_bounds = array<i64: 32, 1>}, {transform_indices = @transform_10, window_bounds = array<i64: 1, 32, 256>}]} {
    %c0 = arith.constant 0 : index
    %c0_0 = arith.constant 0 : index
    %c0_1 = arith.constant 0 : index
    %0 = vector.load %arg1[%c0, %c0_0, %c0_1] : memref<1x32x256xf32, #tpu.memory_space<vmem>>, vector<1x32x256xf32>
    %1 = vector.shape_cast %0 : vector<1x32x256xf32> to vector<32x256xf32>
    %cst = arith.constant dense<0.000000e+00> : vector<32xf32>
    %2 = vector.multi_reduction <add>, %1, %cst [1] : vector<32x256xf32> to vector<32xf32>
    %3 = vector.shape_cast %2 : vector<32xf32> to vector<32x1xf32>
    %cst_2 = arith.constant 2.560000e+02 : f32
    %4 = vector.broadcast %cst_2 : f32 to vector<32x1xf32>
    %5 = arith.divf %3, %4 : vector<32x1xf32>
    %c0_3 = arith.constant 0 : index
    %c0_4 = arith.constant 0 : index
    %6 = vector.load %arg2[%c0_3, %c0_4] : memref<32x2xf32, #tpu.memory_space<vmem>>, vector<32x2xf32>
    %7 = vector.broadcast %5 : vector<32x1xf32> to vector<32x2xf32>
    %8 = arith.mulf %6, %7 : vector<32x2xf32>
    %cst_5 = arith.constant dense<0.000000e+00> : vector<2xf32>
    %9 = vector.multi_reduction <add>, %8, %cst_5 [0] : vector<32x2xf32> to vector<2xf32>
    %10 = vector.shape_cast %9 : vector<2xf32> to vector<1x2xf32>
    %cst_6 = arith.constant 0.000000e+00 : f32
    %11 = vector.broadcast %cst_6 : f32 to vector<1x2xf32>
    %12 = arith.maximumf %10, %11 : vector<1x2xf32>
    %c0_7 = arith.constant 0 : index
    %c0_8 = arith.constant 0 : index
    %13 = vector.load %arg3[%c0_7, %c0_8] : memref<32x2xf32, #tpu.memory_space<vmem>>, vector<32x2xf32>
    %14 = vector.broadcast %12 : vector<1x2xf32> to vector<32x2xf32>
    %15 = arith.mulf %13, %14 : vector<32x2xf32>
    %cst_9 = arith.constant dense<0.000000e+00> : vector<32xf32>
    %16 = vector.multi_reduction <add>, %15, %cst_9 [1] : vector<32x2xf32> to vector<32xf32>
    %17 = vector.shape_cast %16 : vector<32xf32> to vector<32x1xf32>
    %cst_10 = arith.constant 3.000000e+00 : f32
    %18 = vector.broadcast %cst_10 : f32 to vector<32x1xf32>
    %19 = arith.addf %17, %18 : vector<32x1xf32>
    %cst_11 = arith.constant 0.000000e+00 : f32
    %cst_12 = arith.constant 6.000000e+00 : f32
    %20 = vector.broadcast %cst_11 : f32 to vector<32x1xf32>
    %21 = arith.maximumf %20, %19 : vector<32x1xf32>
    %22 = vector.broadcast %cst_12 : f32 to vector<32x1xf32>
    %23 = arith.minimumf %22, %21 : vector<32x1xf32>
    %cst_13 = arith.constant 0.333333343 : f32
    %24 = vector.broadcast %cst_13 : f32 to vector<32x1xf32>
    %25 = arith.mulf %23, %24 : vector<32x1xf32>
    %c0_14 = arith.constant 0 : index
    %c0_15 = arith.constant 0 : index
    %26 = vector.load %arg4[%c0_14, %c0_15] : memref<16x32xf32, #tpu.memory_space<vmem>>, vector<16x32xf32>
    %cst_16 = arith.constant dense<0.000000e+00> : vector<16x256xf32>
    %27 = tpu.matmul %26, %1, %cst_16 {dimension_numbers = #tpu.dot_dimension_numbers<[1], [0], [0], [1], [0, 0, 1, 1], [], []>} : vector<16x32xf32>, vector<32x256xf32>, vector<16x256xf32> -> vector<16x256xf32>
    %c0_17 = arith.constant 0 : index
    %c0_18 = arith.constant 0 : index
    %28 = vector.load %arg5[%c0_17, %c0_18] : memref<16x1xf32, #tpu.memory_space<vmem>>, vector<16x1xf32>
    %29 = vector.broadcast %28 : vector<16x1xf32> to vector<16x256xf32>
    %30 = arith.addf %27, %29 : vector<16x256xf32>
    %cst_19 = arith.constant 0.000000e+00 : f32
    %31 = vector.broadcast %cst_19 : f32 to vector<16x256xf32>
    %32 = arith.maximumf %30, %31 : vector<16x256xf32>
    %c68_i32 = arith.constant 68 : i32
    %33 = tpu.dynamic_rotate %32 by %c68_i32 dim 1 : vector<16x256xf32>, i32 -> vector<16x256xf32>
    %c0_20 = arith.constant 0 : index
    %c0_21 = arith.constant 0 : index
    %c0_22 = arith.constant 0 : index
    %34 = vector.load %arg7[%c0_20, %c0_21, %c0_22] : memref<9x1x256xf32, #tpu.memory_space<vmem>>, vector<1x1x256xf32>
    %35 = vector.shape_cast %34 : vector<1x1x256xf32> to vector<1x256xf32>
    %36 = vector.broadcast %35 : vector<1x256xf32> to vector<16x256xf32>
    %37 = arith.mulf %33, %36 : vector<16x256xf32>
    %c64_i32 = arith.constant 64 : i32
    %38 = tpu.dynamic_rotate %32 by %c64_i32 dim 1 : vector<16x256xf32>, i32 -> vector<16x256xf32>
    %c1 = arith.constant 1 : index
    %c0_23 = arith.constant 0 : index
    %c0_24 = arith.constant 0 : index
    %39 = vector.load %arg7[%c1, %c0_23, %c0_24] : memref<9x1x256xf32, #tpu.memory_space<vmem>>, vector<1x1x256xf32>
    %40 = vector.shape_cast %39 : vector<1x1x256xf32> to vector<1x256xf32>
    %41 = vector.broadcast %40 : vector<1x256xf32> to vector<16x256xf32>
    %42 = arith.mulf %38, %41 : vector<16x256xf32>
    %c60_i32 = arith.constant 60 : i32
    %43 = tpu.dynamic_rotate %32 by %c60_i32 dim 1 : vector<16x256xf32>, i32 -> vector<16x256xf32>
    %c2 = arith.constant 2 : index
    %c0_25 = arith.constant 0 : index
    %c0_26 = arith.constant 0 : index
    %44 = vector.load %arg7[%c2, %c0_25, %c0_26] : memref<9x1x256xf32, #tpu.memory_space<vmem>>, vector<1x1x256xf32>
    %45 = vector.shape_cast %44 : vector<1x1x256xf32> to vector<1x256xf32>
    %46 = vector.broadcast %45 : vector<1x256xf32> to vector<16x256xf32>
    %47 = arith.mulf %43, %46 : vector<16x256xf32>
    %c4_i32 = arith.constant 4 : i32
    %48 = tpu.dynamic_rotate %32 by %c4_i32 dim 1 : vector<16x256xf32>, i32 -> vector<16x256xf32>
    %c3 = arith.constant 3 : index
    %c0_27 = arith.constant 0 : index
    %c0_28 = arith.constant 0 : index
    %49 = vector.load %arg7[%c3, %c0_27, %c0_28] : memref<9x1x256xf32, #tpu.memory_space<vmem>>, vector<1x1x256xf32>
    %50 = vector.shape_cast %49 : vector<1x1x256xf32> to vector<1x256xf32>
    %51 = vector.broadcast %50 : vector<1x256xf32> to vector<16x256xf32>
    %52 = arith.mulf %48, %51 : vector<16x256xf32>
    %c252_i32 = arith.constant 252 : i32
    %53 = tpu.dynamic_rotate %32 by %c252_i32 dim 1 : vector<16x256xf32>, i32 -> vector<16x256xf32>
    %c5 = arith.constant 5 : index
    %c0_29 = arith.constant 0 : index
    %c0_30 = arith.constant 0 : index
    %54 = vector.load %arg7[%c5, %c0_29, %c0_30] : memref<9x1x256xf32, #tpu.memory_space<vmem>>, vector<1x1x256xf32>
    %55 = vector.shape_cast %54 : vector<1x1x256xf32> to vector<1x256xf32>
    %56 = vector.broadcast %55 : vector<1x256xf32> to vector<16x256xf32>
    %57 = arith.mulf %53, %56 : vector<16x256xf32>
    %c196_i32 = arith.constant 196 : i32
    %58 = tpu.dynamic_rotate %32 by %c196_i32 dim 1 : vector<16x256xf32>, i32 -> vector<16x256xf32>
    %c6 = arith.constant 6 : index
    %c0_31 = arith.constant 0 : index
    %c0_32 = arith.constant 0 : index
    %59 = vector.load %arg7[%c6, %c0_31, %c0_32] : memref<9x1x256xf32, #tpu.memory_space<vmem>>, vector<1x1x256xf32>
    %60 = vector.shape_cast %59 : vector<1x1x256xf32> to vector<1x256xf32>
    %61 = vector.broadcast %60 : vector<1x256xf32> to vector<16x256xf32>
    %62 = arith.mulf %58, %61 : vector<16x256xf32>
    %c192_i32 = arith.constant 192 : i32
    %63 = tpu.dynamic_rotate %32 by %c192_i32 dim 1 : vector<16x256xf32>, i32 -> vector<16x256xf32>
    %c7 = arith.constant 7 : index
    %c0_33 = arith.constant 0 : index
    %c0_34 = arith.constant 0 : index
    %64 = vector.load %arg7[%c7, %c0_33, %c0_34] : memref<9x1x256xf32, #tpu.memory_space<vmem>>, vector<1x1x256xf32>
    %65 = vector.shape_cast %64 : vector<1x1x256xf32> to vector<1x256xf32>
    %66 = vector.broadcast %65 : vector<1x256xf32> to vector<16x256xf32>
    %67 = arith.mulf %63, %66 : vector<16x256xf32>
    %c188_i32 = arith.constant 188 : i32
    %68 = tpu.dynamic_rotate %32 by %c188_i32 dim 1 : vector<16x256xf32>, i32 -> vector<16x256xf32>
    %c8 = arith.constant 8 : index
    %c0_35 = arith.constant 0 : index
    %c0_36 = arith.constant 0 : index
    %69 = vector.load %arg7[%c8, %c0_35, %c0_36] : memref<9x1x256xf32, #tpu.memory_space<vmem>>, vector<1x1x256xf32>
    %70 = vector.shape_cast %69 : vector<1x1x256xf32> to vector<1x256xf32>
    %71 = vector.broadcast %70 : vector<1x256xf32> to vector<16x256xf32>
    %72 = arith.mulf %68, %71 : vector<16x256xf32>
    %73 = tpu.concatenate %37, %42, %47, %52, %32, %57, %62, %67, %72 in 0 : vector<16x256xf32>, vector<16x256xf32>, vector<16x256xf32>, vector<16x256xf32>, vector<16x256xf32>, vector<16x256xf32>, vector<16x256xf32>, vector<16x256xf32>, vector<16x256xf32> -> vector<144x256xf32>
    %c0_37 = arith.constant 0 : index
    %c0_38 = arith.constant 0 : index
    %74 = vector.load %arg6[%c0_37, %c0_38] : memref<16x144xf32, #tpu.memory_space<vmem>>, vector<16x144xf32>
    %cst_39 = arith.constant dense<0.000000e+00> : vector<16x256xf32>
    %75 = tpu.matmul %74, %73, %cst_39 {dimension_numbers = #tpu.dot_dimension_numbers<[1], [0], [0], [1], [0, 0, 1, 1], [], []>} : vector<16x144xf32>, vector<144x256xf32>, vector<16x256xf32> -> vector<16x256xf32>
    %c0_40 = arith.constant 0 : index
    %c0_41 = arith.constant 0 : index
    %76 = vector.load %arg8[%c0_40, %c0_41] : memref<16x1xf32, #tpu.memory_space<vmem>>, vector<16x1xf32>
    %77 = vector.broadcast %76 : vector<16x1xf32> to vector<16x256xf32>
    %78 = arith.addf %75, %77 : vector<16x256xf32>
    %cst_42 = arith.constant 0.000000e+00 : f32
    %79 = vector.broadcast %cst_42 : f32 to vector<16x256xf32>
    %80 = arith.maximumf %78, %79 : vector<16x256xf32>
    %c0_43 = arith.constant 0 : index
    %c0_44 = arith.constant 0 : index
    %81 = vector.load %arg9[%c0_43, %c0_44] : memref<32x16xf32, #tpu.memory_space<vmem>>, vector<32x16xf32>
    %cst_45 = arith.constant dense<0.000000e+00> : vector<32x256xf32>
    %82 = tpu.matmul %81, %80, %cst_45 {dimension_numbers = #tpu.dot_dimension_numbers<[1], [0], [0], [1], [0, 0, 1, 1], [], []>} : vector<32x16xf32>, vector<16x256xf32>, vector<32x256xf32> -> vector<32x256xf32>
    %c0_46 = arith.constant 0 : index
    %c0_47 = arith.constant 0 : index
    %83 = vector.load %arg10[%c0_46, %c0_47] : memref<32x1xf32, #tpu.memory_space<vmem>>, vector<32x1xf32>
    %84 = vector.broadcast %83 : vector<32x1xf32> to vector<32x256xf32>
    %85 = arith.addf %82, %84 : vector<32x256xf32>
    %cst_48 = arith.constant 0.000000e+00 : f32
    %86 = vector.broadcast %cst_48 : f32 to vector<32x256xf32>
    %87 = arith.maximumf %85, %86 : vector<32x256xf32>
    %cst_49 = arith.constant 3.000000e+00 : f32
    %88 = vector.broadcast %cst_49 : f32 to vector<32x256xf32>
    %89 = arith.addf %87, %88 : vector<32x256xf32>
    %cst_50 = arith.constant 0.000000e+00 : f32
    %cst_51 = arith.constant 6.000000e+00 : f32
    %90 = vector.broadcast %cst_50 : f32 to vector<32x256xf32>
    %91 = arith.maximumf %90, %89 : vector<32x256xf32>
    %92 = vector.broadcast %cst_51 : f32 to vector<32x256xf32>
    %93 = arith.minimumf %92, %91 : vector<32x256xf32>
    %cst_52 = arith.constant 0.333333343 : f32
    %94 = vector.broadcast %cst_52 : f32 to vector<32x256xf32>
    %95 = arith.mulf %93, %94 : vector<32x256xf32>
    %96 = vector.broadcast %25 : vector<32x1xf32> to vector<32x256xf32>
    %97 = arith.mulf %1, %96 : vector<32x256xf32>
    %98 = arith.mulf %97, %95 : vector<32x256xf32>
    %c0_53 = arith.constant 0 : index
    %c0_54 = arith.constant 0 : index
    %c0_55 = arith.constant 0 : index
    %99 = vector.load %arg11[%c0_53, %c0_54, %c0_55] : memref<1x32x256xf32, #tpu.memory_space<vmem>>, vector<1x32x256xf32>
    %100 = vector.shape_cast %99 : vector<1x32x256xf32> to vector<32x256xf32>
    %101 = vector.shape_cast %98 : vector<32x256xf32> to vector<1x32x256xf32>
    tpu.vector_store %arg11[%c0_53, %c0_54, %c0_55], %101 {strides = array<i32>} : memref<1x32x256xf32, #tpu.memory_space<vmem>>, vector<1x32x256xf32>,
    return
  }
  func.func @transform_0(%arg0: i32) -> (i32, i32, i32) {
    %c0_i32 = arith.constant 0 : i32
    %c0_i32_0 = arith.constant 0 : i32
    %c0_i32_1 = arith.constant 0 : i32
    return %arg0, %c0_i32, %c0_i32_0 : i32, i32, i32
  }
  func.func @transform_1(%arg0: i32) -> (i32, i32) {
    %c0_i32 = arith.constant 0 : i32
    %c0_i32_0 = arith.constant 0 : i32
    %c0_i32_1 = arith.constant 0 : i32
    return %c0_i32, %c0_i32_0 : i32, i32
  }
  func.func @transform_2(%arg0: i32) -> (i32, i32) {
    %c0_i32 = arith.constant 0 : i32
    %c0_i32_0 = arith.constant 0 : i32
    %c0_i32_1 = arith.constant 0 : i32
    return %c0_i32, %c0_i32_0 : i32, i32
  }
  func.func @transform_3(%arg0: i32) -> (i32, i32) {
    %c0_i32 = arith.constant 0 : i32
    %c0_i32_0 = arith.constant 0 : i32
    %c0_i32_1 = arith.constant 0 : i32
    return %c0_i32, %c0_i32_0 : i32, i32
  }
  func.func @transform_4(%arg0: i32) -> (i32, i32) {
    %c0_i32 = arith.constant 0 : i32
    %c0_i32_0 = arith.constant 0 : i32
    %c0_i32_1 = arith.constant 0 : i32
    return %c0_i32, %c0_i32_0 : i32, i32
  }
  func.func @transform_5(%arg0: i32) -> (i32, i32) {
    %c0_i32 = arith.constant 0 : i32
    %c0_i32_0 = arith.constant 0 : i32
    %c0_i32_1 = arith.constant 0 : i32
    return %c0_i32, %c0_i32_0 : i32, i32
  }
  func.func @transform_6(%arg0: i32) -> (i32, i32, i32) {
    %c0_i32 = arith.constant 0 : i32
    %c0_i32_0 = arith.constant 0 : i32
    %c0_i32_1 = arith.constant 0 : i32
    %c0_i32_2 = arith.constant 0 : i32
    return %c0_i32, %c0_i32_0, %c0_i32_1 : i32, i32, i32
  }
  func.func @transform_7(%arg0: i32) -> (i32, i32) {
    %c0_i32 = arith.constant 0 : i32
    %c0_i32_0 = arith.constant 0 : i32
    %c0_i32_1 = arith.constant 0 : i32
    return %c0_i32, %c0_i32_0 : i32, i32
  }
  func.func @transform_8(%arg0: i32) -> (i32, i32) {
    %c0_i32 = arith.constant 0 : i32
    %c0_i32_0 = arith.constant 0 : i32
    %c0_i32_1 = arith.constant 0 : i32
    return %c0_i32, %c0_i32_0 : i32, i32
  }
  func.func @transform_9(%arg0: i32) -> (i32, i32) {
    %c0_i32 = arith.constant 0 : i32
    %c0_i32_0 = arith.constant 0 : i32
    %c0_i32_1 = arith.constant 0 : i32
    return %c0_i32, %c0_i32_0 : i32, i32
  }
  func.func @transform_10(%arg0: i32) -> (i32, i32, i32) {
    %c0_i32 = arith.constant 0 : i32
    %c0_i32_0 = arith.constant 0 : i32
    %c0_i32_1 = arith.constant 0 : i32
    return %arg0, %c0_i32, %c0_i32_0 : i32, i32, i32
  }
}

</mosaic_0001>

<llo_original>
// kernel: tpu_custom_call.1
$region0: #{tpu_custom_call.1}
  #allocation0 [shape = 'u32[]', space=smem, size = 0x4, offset = 0x4, fixed_abs, tag = 'smem constant byte address 0x4 - core index']
  #allocation1 [shape = 'u32[72,128]{1,0:T(1,128)}', space=vmem, size = 0x9000, scoped, tag = 'internal scratch']
  %s0 = inlined_call_operand.hbm [shape: f32[2,32,256], index: 0, kind: input, shape index: {}]
  %s1 = inlined_call_operand.vmem [shape: f32[32,2], index: 1, kind: input, shape index: {}]
  %s2 = inlined_call_operand.vmem [shape: f32[32,2], index: 2, kind: input, shape index: {}]
  %s3 = inlined_call_operand.vmem [shape: f32[16,32], index: 3, kind: input, shape index: {}]
  %s4 = inlined_call_operand.vmem [shape: f32[16,1], index: 4, kind: input, shape index: {}]
  %s5 = inlined_call_operand.vmem [shape: f32[16,144], index: 5, kind: input, shape index: {}]
  %s6 = inlined_call_operand.vmem [shape: f32[9,1,256], index: 6, kind: input, shape index: {}]
  %s7 = inlined_call_operand.vmem [shape: f32[16,1], index: 7, kind: input, shape index: {}]
  %s8 = inlined_call_operand.vmem [shape: f32[32,16], index: 8, kind: input, shape index: {}]
  %s9 = inlined_call_operand.vmem [shape: f32[32,1], index: 9, kind: input, shape index: {}]
  %s10 = inlined_call_operand.hbm [shape: f32[2,32,256], index: 10, kind: output, shape index: {}]
  %s11 = sld [smem:[#allocation0]]
  $region77: #{tpu_custom_call.1} parent=0
    _
  %s13 = ssub.s32 1, %s11
  %s14 = scalar_select 0, %s13, %s11
  $region1: #{tpu_custom_call.1} parent=0
    #allocation2 [shape = 'u8[65536]{0}', space=vmem, size = 0x10000, scoped, tag = 'input window, operand 0']
    #allocation3 [shape = 's32[2]{0}', space=sflag, size = 0x8, scoped, tag = 'scoped memory for tpu_custom_call.1']
    #allocation4 [shape = 's32[2]{0}', space=sflag, size = 0x8, scoped, tag = 'scoped memory for tpu_custom_call.1']
    #allocation5 [shape = 'u8[65536]{0}', space=vmem, size = 0x10000, scoped, tag = 'output window, operand 0']
    %15 = vsyncpa [#allocation3], 0
    %s16 = scalar_lea.sflag [#allocation3], 1
    %17 = vsyncpa %s16, 0
    %18 = vsyncpa [#allocation4], 0
    %s19 = scalar_lea.sflag [#allocation4], 1
    %20 = vsyncpa %s19, 0
    loop: start=0, step=1, limit=4
    $region2: #{tpu_custom_call.1} parent=1 // loop_pre_header
      _
    $region3: #{tpu_custom_call.1} parent=1 // loop_header
      %s22 = sphi 0, %s26
      %p23 = scmp.ge.s32.totalorder %s22, 4
      %s32 = sphi 0, %s34
      %s35 = sphi 0, %s32
      %s36 = sphi 0, %s35
      %s52 = sphi 0, %s36
      %s56 = sphi 0, %s56
      %s58 = sphi 0, %s56
      %s59 = sphi 0, %s58
      %s73 = sphi 0, %s59
      %s77 = sphi 0, %s77
      %s79 = sphi 0, %s77
      %s80 = sphi 0, %s79
      %s94 = sphi 0, %s80
      %s98 = sphi 0, %s98
      %s100 = sphi 0, %s98
      %s101 = sphi 0, %s100
      %s115 = sphi 0, %s101
      %s119 = sphi 0, %s119
      %s121 = sphi 0, %s119
      %s122 = sphi 0, %s121
      %s136 = sphi 0, %s122
      %s140 = sphi 0, %s140
      %s142 = sphi 0, %s140
      %s143 = sphi 0, %s142
      %s157 = sphi 0, %s143
      %s161 = sphi 0, %s161
      %s163 = sphi 0, %s161
      %s164 = sphi 0, %s163
      %s178 = sphi 0, %s164
      %s182 = sphi 0, %s182
      %s184 = sphi 0, %s182
      %s185 = sphi 0, %s184
      %s199 = sphi 0, %s185
      %s203 = sphi 0, %s203
      %s205 = sphi 0, %s203
      %s206 = sphi 0, %s205
      %s220 = sphi 0, %s206
      %s224 = sphi 0, %s224
      %s226 = sphi 0, %s224
      %s227 = sphi 0, %s226
      %s241 = sphi 0, %s227
      %s247 = sphi 0, %s249
      %s250 = sphi 0, %s247
      %s251 = sphi 0, %s250
      %s267 = sphi 0, %s251
    $region4: #{tpu_custom_call.1} parent=1 // loop_header_branch
      %25 = sbr.rel (%p23) target = $region8
    $region5: #{tpu_custom_call.1} parent=1 // loop_body
      %s27 = ssub.s32 %s22, 1
      %s28 = ssub.s32 %s22, 2
      %s29 = sadd.s32 %s22, 1
      %s30 = ssub.s32 %s22, %s29
      %p31 = scmp.eq.s32.totalorder %s30, 0
      %s33 = sadd.s32 %s32, 1
      %s34 = scalar_select %p31, %s32, %s33
      %p37 = pneg %p31
      %p38 = scmp.eq.s32.totalorder %s22, 1
      %p39 = por %p37, %p38
      %p40 = scmp.ne.s32.totalorder %s32, %s35
      %p41 = scmp.eq.s32.totalorder %s22, 0
      %p42 = por %p40, %p41
      %p43 = scmp.ne.s32.totalorder %s32, %s35
      %p44 = scmp.eq.s32.totalorder %s27, 1
      %p45 = por %p43, %p44
      %p46 = scmp.ne.s32.totalorder %s35, %s36
      %p47 = scmp.eq.s32.totalorder %s27, 0
      %p48 = por %p46, %p47
      %p49 = scmp.ne.s32.totalorder %s35, %s36
      %p50 = scmp.eq.s32.totalorder %s28, 1
      %p51 = por %p49, %p50
      %p53 = scmp.ne.s32.totalorder %s36, %s52
      %p54 = scmp.eq.s32.totalorder %s28, 0
      %p55 = por %p53, %p54
      %s57 = sadd.s32 %s56, 1
      %p60 = scmp.eq.s32.totalorder %s22, 1
      %p61 = scmp.ne.s32.totalorder %s56, %s58
      %p62 = scmp.eq.s32.totalorder %s22, 0
      %p63 = por %p61, %p62
      %p64 = scmp.ne.s32.totalorder %s56, %s58
      %p65 = scmp.eq.s32.totalorder %s27, 1
      %p66 = por %p64, %p65
      %p67 = scmp.ne.s32.totalorder %s58, %s59
      %p68 = scmp.eq.s32.totalorder %s27, 0
      %p69 = por %p67, %p68
      %p70 = scmp.ne.s32.totalorder %s58, %s59
      %p71 = scmp.eq.s32.totalorder %s28, 1
      %p72 = por %p70, %p71
      %p74 = scmp.ne.s32.totalorder %s59, %s73
      %p75 = scmp.eq.s32.totalorder %s28, 0
      %p76 = por %p74, %p75
      %s78 = sadd.s32 %s77, 1
      %p81 = scmp.eq.s32.totalorder %s22, 1
      %p82 = scmp.ne.s32.totalorder %s77, %s79
      %p83 = scmp.eq.s32.totalorder %s22, 0
      %p84 = por %p82, %p83
      %p85 = scmp.ne.s32.totalorder %s77, %s79
      %p86 = scmp.eq.s32.totalorder %s27, 1
      %p87 = por %p85, %p86
      %p88 = scmp.ne.s32.totalorder %s79, %s80
      %p89 = scmp.eq.s32.totalorder %s27, 0
      %p90 = por %p88, %p89
      %p91 = scmp.ne.s32.totalorder %s79, %s80
      %p92 = scmp.eq.s32.totalorder %s28, 1
      %p93 = por %p91, %p92
      %p95 = scmp.ne.s32.totalorder %s80, %s94
      %p96 = scmp.eq.s32.totalorder %s28, 0
      %p97 = por %p95, %p96
      %s99 = sadd.s32 %s98, 1
      %p102 = scmp.eq.s32.totalorder %s22, 1
      %p103 = scmp.ne.s32.totalorder %s98, %s100
      %p104 = scmp.eq.s32.totalorder %s22, 0
      %p105 = por %p103, %p104
      %p106 = scmp.ne.s32.totalorder %s98, %s100
      %p107 = scmp.eq.s32.totalorder %s27, 1
      %p108 = por %p106, %p107
      %p109 = scmp.ne.s32.totalorder %s100, %s101
      %p110 = scmp.eq.s32.totalorder %s27, 0
      %p111 = por %p109, %p110
      %p112 = scmp.ne.s32.totalorder %s100, %s101
      %p113 = scmp.eq.s32.totalorder %s28, 1
      %p114 = por %p112, %p113
      %p116 = scmp.ne.s32.totalorder %s101, %s115
      %p117 = scmp.eq.s32.totalorder %s28, 0
      %p118 = por %p116, %p117
      %s120 = sadd.s32 %s119, 1
      %p123 = scmp.eq.s32.totalorder %s22, 1
      %p124 = scmp.ne.s32.totalorder %s119, %s121
      %p125 = scmp.eq.s32.totalorder %s22, 0
      %p126 = por %p124, %p125
      %p127 = scmp.ne.s32.totalorder %s119, %s121
      %p128 = scmp.eq.s32.totalorder %s27, 1
      %p129 = por %p127, %p128
      %p130 = scmp.ne.s32.totalorder %s121, %s122
      %p131 = scmp.eq.s32.totalorder %s27, 0
      %p132 = por %p130, %p131
      %p133 = scmp.ne.s32.totalorder %s121, %s122
      %p134 = scmp.eq.s32.totalorder %s28, 1
      %p135 = por %p133, %p134
      %p137 = scmp.ne.s32.totalorder %s122, %s136
      %p138 = scmp.eq.s32.totalorder %s28, 0
      %p139 = por %p137, %p138
      %s141 = sadd.s32 %s140, 1
      %p144 = scmp.eq.s32.totalorder %s22, 1
      %p145 = scmp.ne.s32.totalorder %s140, %s142
      %p146 = scmp.eq.s32.totalorder %s22, 0
      %p147 = por %p145, %p146
      %p148 = scmp.ne.s32.totalorder %s140, %s142
      %p149 = scmp.eq.s32.totalorder %s27, 1
      %p150 = por %p148, %p149
      %p151 = scmp.ne.s32.totalorder %s142, %s143
      %p152 = scmp.eq.s32.totalorder %s27, 0
      %p153 = por %p151, %p152
      %p154 = scmp.ne.s32.totalorder %s142, %s143
      %p155 = scmp.eq.s32.totalorder %s28, 1
      %p156 = por %p154, %p155
      %p158 = scmp.ne.s32.totalorder %s143, %s157
      %p159 = scmp.eq.s32.totalorder %s28, 0
      %p160 = por %p158, %p159
      %s162 = sadd.s32 %s161, 1
      %p165 = scmp.eq.s32.totalorder %s22, 1
      %p166 = scmp.ne.s32.totalorder %s161, %s163
      %p167 = scmp.eq.s32.totalorder %s22, 0
      %p168 = por %p166, %p167
      %p169 = scmp.ne.s32.totalorder %s161, %s163
      %p170 = scmp.eq.s32.totalorder %s27, 1
      %p171 = por %p169, %p170
      %p172 = scmp.ne.s32.totalorder %s163, %s164
      %p173 = scmp.eq.s32.totalorder %s27, 0
      %p174 = por %p172, %p173
      %p175 = scmp.ne.s32.totalorder %s163, %s164
      %p176 = scmp.eq.s32.totalorder %s28, 1
      %p177 = por %p175, %p176
      %p179 = scmp.ne.s32.totalorder %s164, %s178
      %p180 = scmp.eq.s32.totalorder %s28, 0
      %p181 = por %p179, %p180
      %s183 = sadd.s32 %s182, 1
      %p186 = scmp.eq.s32.totalorder %s22, 1
      %p187 = scmp.ne.s32.totalorder %s182, %s184
      %p188 = scmp.eq.s32.totalorder %s22, 0
      %p189 = por %p187, %p188
      %p190 = scmp.ne.s32.totalorder %s182, %s184
      %p191 = scmp.eq.s32.totalorder %s27, 1
      %p192 = por %p190, %p191
      %p193 = scmp.ne.s32.totalorder %s184, %s185
      %p194 = scmp.eq.s32.totalorder %s27, 0
      %p195 = por %p193, %p194
      %p196 = scmp.ne.s32.totalorder %s184, %s185
      %p197 = scmp.eq.s32.totalorder %s28, 1
      %p198 = por %p196, %p197
      %p200 = scmp.ne.s32.totalorder %s185, %s199
      %p201 = scmp.eq.s32.totalorder %s28, 0
      %p202 = por %p200, %p201
      %s204 = sadd.s32 %s203, 1
      %p207 = scmp.eq.s32.totalorder %s22, 1
      %p208 = scmp.ne.s32.totalorder %s203, %s205
      %p209 = scmp.eq.s32.totalorder %s22, 0
      %p210 = por %p208, %p209
      %p211 = scmp.ne.s32.totalorder %s203, %s205
      %p212 = scmp.eq.s32.totalorder %s27, 1
      %p213 = por %p211, %p212
      %p214 = scmp.ne.s32.totalorder %s205, %s206
      %p215 = scmp.eq.s32.totalorder %s27, 0
      %p216 = por %p214, %p215
      %p217 = scmp.ne.s32.totalorder %s205, %s206
      %p218 = scmp.eq.s32.totalorder %s28, 1
      %p219 = por %p217, %p218
      %p221 = scmp.ne.s32.totalorder %s206, %s220
      %p222 = scmp.eq.s32.totalorder %s28, 0
      %p223 = por %p221, %p222
      %s225 = sadd.s32 %s224, 1
      %p228 = scmp.eq.s32.totalorder %s22, 1
      %p229 = scmp.ne.s32.totalorder %s224, %s226
      %p230 = scmp.eq.s32.totalorder %s22, 0
      %p231 = por %p229, %p230
      %p232 = scmp.ne.s32.totalorder %s224, %s226
      %p233 = scmp.eq.s32.totalorder %s27, 1
      %p234 = por %p232, %p233
      %p235 = scmp.ne.s32.totalorder %s226, %s227
      %p236 = scmp.eq.s32.totalorder %s27, 0
      %p237 = por %p235, %p236
      %p238 = scmp.ne.s32.totalorder %s226, %s227
      %p239 = scmp.eq.s32.totalorder %s28, 1
      %p240 = por %p238, %p239
      %p242 = scmp.ne.s32.totalorder %s227, %s241
      %p243 = scmp.eq.s32.totalorder %s28, 0
      %p244 = por %p242, %p243
      %s245 = ssub.s32 %s22, %s29
      %p246 = scmp.eq.s32.totalorder %s245, 0
      %s248 = sadd.s32 %s247, 1
      %s249 = scalar_select %p246, %s247, %s248
      %p252 = pneg %p246
      %p253 = scmp.eq.s32.totalorder %s22, 1
      %p254 = por %p252, %p253
      %p255 = scmp.ne.s32.totalorder %s247, %s250
      %p256 = scmp.eq.s32.totalorder %s22, 0
      %p257 = por %p255, %p256
      %p258 = scmp.ne.s32.totalorder %s247, %s250
      %p259 = scmp.eq.s32.totalorder %s27, 1
      %p260 = por %p258, %p259
      %p261 = scmp.ne.s32.totalorder %s250, %s251
      %p262 = scmp.eq.s32.totalorder %s27, 0
      %p263 = por %p261, %p262
      %p264 = scmp.ne.s32.totalorder %s250, %s251
      %p265 = scmp.eq.s32.totalorder %s28, 1
      %p266 = por %p264, %p265
      %p268 = scmp.ne.s32.totalorder %s251, %s267
      %p269 = scmp.eq.s32.totalorder %s28, 0
      %p270 = por %p268, %p269
      %p271 = scmp.le.s32.totalorder 1, %s22
      %p272 = scmp.lt.s32.totalorder %s22, 3
      %p273 = pnand %p271, %p272
      %p274 = pneg %p273
      // Predicated region
      $region9: #{tpu_custom_call.1} parent=5 // pred_check
        _
      $region10: #{tpu_custom_call.1} parent=5 // pred_check_branch
        %276 = sbr.rel (%p273) target = $region12
      $region11: #{tpu_custom_call.1} parent=5 // pred_region
        %s277 = ssub.s32 %s22, 1
        // Predicated region
        $region13: #{tpu_custom_call.1} parent=11 // pred_check
          %p278 = pneg %p69
        $region14: #{tpu_custom_call.1} parent=11 // pred_check_branch
          %280 = sbr.rel (%p278) target = $region16
        $region15: #{tpu_custom_call.1} parent=11 // pred_region
          _
        $region16: #{tpu_custom_call.1} parent=11 // pred_fallthru
          _
        // Predicated region
        $region17: #{tpu_custom_call.1} parent=11 // pred_check
          %p281 = pneg %p90
        $region18: #{tpu_custom_call.1} parent=11 // pred_check_branch
          %283 = sbr.rel (%p281) target = $region20
        $region19: #{tpu_custom_call.1} parent=11 // pred_region
          _
        $region20: #{tpu_custom_call.1} parent=11 // pred_fallthru
          _
        // Predicated region
        $region21: #{tpu_custom_call.1} parent=11 // pred_check
          %p284 = pneg %p111
        $region22: #{tpu_custom_call.1} parent=11 // pred_check_branch
          %286 = sbr.rel (%p284) target = $region24
        $region23: #{tpu_custom_call.1} parent=11 // pred_region
          _
        $region24: #{tpu_custom_call.1} parent=11 // pred_fallthru
          _
        // Predicated region
        $region25: #{tpu_custom_call.1} parent=11 // pred_check
          %p287 = pneg %p132
        $region26: #{tpu_custom_call.1} parent=11 // pred_check_branch
          %289 = sbr.rel (%p287) target = $region28
        $region27: #{tpu_custom_call.1} parent=11 // pred_region
          _
        $region28: #{tpu_custom_call.1} parent=11 // pred_fallthru
          _
        // Predicated region
        $region29: #{tpu_custom_call.1} parent=11 // pred_check
          %p290 = pneg %p153
        $region30: #{tpu_custom_call.1} parent=11 // pred_check_branch
          %292 = sbr.rel (%p290) target = $region32
        $region31: #{tpu_custom_call.1} parent=11 // pred_region
          _
        $region32: #{tpu_custom_call.1} parent=11 // pred_fallthru
          _
        // Predicated region
        $region33: #{tpu_custom_call.1} parent=11 // pred_check
          %p293 = pneg %p174
        $region34: #{tpu_custom_call.1} parent=11 // pred_check_branch
          %295 = sbr.rel (%p293) target = $region36
        $region35: #{tpu_custom_call.1} parent=11 // pred_region
          _
        $region36: #{tpu_custom_call.1} parent=11 // pred_fallthru
          _
        // Predicated region
        $region37: #{tpu_custom_call.1} parent=11 // pred_check
          %p296 = pneg %p195
        $region38: #{tpu_custom_call.1} parent=11 // pred_check_branch
          %298 = sbr.rel (%p296) target = $region40
        $region39: #{tpu_custom_call.1} parent=11 // pred_region
          _
        $region40: #{tpu_custom_call.1} parent=11 // pred_fallthru
          _
        // Predicated region
        $region41: #{tpu_custom_call.1} parent=11 // pred_check
          %p299 = pneg %p216
        $region42: #{tpu_custom_call.1} parent=11 // pred_check_branch
          %301 = sbr.rel (%p299) target = $region44
        $region43: #{tpu_custom_call.1} parent=11 // pred_region
          _
        $region44: #{tpu_custom_call.1} parent=11 // pred_fallthru
          _
        // Predicated region
        $region45: #{tpu_custom_call.1} parent=11 // pred_check
          %p302 = pneg %p237
        $region46: #{tpu_custom_call.1} parent=11 // pred_check_branch
          %304 = sbr.rel (%p302) target = $region48
        $region47: #{tpu_custom_call.1} parent=11 // pred_region
          _
        $region48: #{tpu_custom_call.1} parent=11 // pred_fallthru
          _
      $region12: #{tpu_custom_call.1} parent=5 // pred_fallthru
        _
      %p305 = scmp.lt.s32.totalorder %s22, 2
      // Predicated region
      $region49: #{tpu_custom_call.1} parent=5 // pred_check
        %p306 = pneg %p305
      $region50: #{tpu_custom_call.1} parent=5 // pred_check_branch
        %308 = sbr.rel (%p306) target = $region52
      $region51: #{tpu_custom_call.1} parent=5 // pred_region
        // Predicated region
        $region53: #{tpu_custom_call.1} parent=51 // pred_check
          %p309 = pneg %p42
        $region54: #{tpu_custom_call.1} parent=51 // pred_check_branch
          %311 = sbr.rel (%p309) target = $region56
        $region55: #{tpu_custom_call.1} parent=51 // pred_region
          %s312 = sand.u32 %s32, 1
          %s313 = scalar_lea.sflag [#allocation3], %s312
          %s314 = sand.u32 %s32, 1
          %s315 = smul.addr %s314, 64
          %s316 = scalar_lea.vmem [#allocation2], %s315
          %318 = vsyncadd %s313, 0
          %s319 = smul.addr %s22, 8
          %s320 = smul.addr %s319, 8
          %s321 = scalar_lea.hbm %s0, %s320
          %s322 = sshll.u32 %s321, 4
          %s323 = int_to_ptr.hbm [resolvable:$true] %s322
          %s324 = sshll.u32 %s316, 4
          %s325 = int_to_ptr.vmem [resolvable:$true] %s324
          %330 = dma.hbm_to_vmem [thread:$0]  %s323, 1024, %s325, %s313, 256, 256, 16
        $region56: #{tpu_custom_call.1} parent=51 // pred_fallthru
          _
      $region52: #{tpu_custom_call.1} parent=5 // pred_fallthru
        _
      %p331 = scmp.le.s32.totalorder 1, %s22
      %p332 = scmp.lt.s32.totalorder %s22, 3
      %p333 = pnand %p331, %p332
      %p334 = pneg %p333
      // Predicated region
      $region57: #{tpu_custom_call.1} parent=5 // pred_check
        _
      $region58: #{tpu_custom_call.1} parent=5 // pred_check_branch
        %336 = sbr.rel (%p333) target = $region60
      $region59: #{tpu_custom_call.1} parent=5 // pred_region
        %s337 = ssub.s32 %s22, 1
        %s338 = sand.u32 %s35, 1
        %s339 = scalar_lea.sflag [#allocation3], %s338
        %s340 = sand.u32 %s35, 1
        %s341 = smul.addr %s340, 64
        %s342 = scalar_lea.vmem [#allocation2], %s341
        // Predicated region
        $region61: #{tpu_custom_call.1} parent=59 // pred_check
          %p343 = pneg %p48
        $region62: #{tpu_custom_call.1} parent=59 // pred_check_branch
          %345 = sbr.rel (%p343) target = $region64
        $region63: #{tpu_custom_call.1} parent=59 // pred_region
          %347 = dma.done %s339, 1024
        $region64: #{tpu_custom_call.1} parent=59 // pred_fallthru
          _
        %s348 = sand.u32 %s35, 1
        %s349 = scalar_lea.sflag [#allocation3], %s348
        %s350 = sand.u32 %s35, 1
        %s351 = smul.addr %s350, 64
        %s352 = scalar_lea.vmem [#allocation2], %s351
        %p353 = pneg %p48
        %p354 = pneg %p45
        %p355 = pneg %p69
        %p356 = pneg %p66
        %p357 = pneg %p90
        %p358 = pneg %p87
        %p359 = pneg %p111
        %p360 = pneg %p108
        %p361 = pneg %p132
        %p362 = pneg %p129
        %p363 = pneg %p153
        %p364 = pneg %p150
        %p365 = pneg %p174
        %p366 = pneg %p171
        %p367 = pneg %p195
        %p368 = pneg %p192
        %p369 = pneg %p216
        %p370 = pneg %p213
        %p371 = pneg %p237
        %p372 = pneg %p234
        %p373 = pneg %p263
        %p374 = pneg %p260
        %s375 = sand.u32 %s250, 1
        %s376 = scalar_lea.sflag [#allocation4], %s375
        %s377 = sand.u32 %s250, 1
        %s378 = smul.addr %s377, 64
        %s379 = scalar_lea.vmem [#allocation5], %s378
        %v380 = vld [vmem:[%s342] sm:$0xff]
        %v381 = vld [vmem:[%s342 + $0x8] sm:$0xff]
        %v382 = vld [vmem:[%s342 + $0x10] sm:$0xff]
        %v383 = vld [vmem:[%s342 + $0x18] sm:$0xff]
        %v384 = vld [vmem:[%s342 + $0x20] sm:$0xff]
        %v385 = vld [vmem:[%s342 + $0x28] sm:$0xff]
        %v386 = vld [vmem:[%s342 + $0x30] sm:$0xff]
        %v387 = vld [vmem:[%s342 + $0x38] sm:$0xff]
        %v388 = vadd.f32 %v380, %v381
        %389 = vadd.xlane.f32.xlu0 %v388
        %v390 = vpop.xlane.xlu0 %389
        %v391 = vadd.f32 %v382, %v383
        %392 = vadd.xlane.f32.xlu0 %v391
        %v393 = vpop.xlane.xlu0 %392
        %v394 = vadd.f32 %v384, %v385
        %395 = vadd.xlane.f32.xlu0 %v394
        %v396 = vpop.xlane.xlu0 %395
        %v397 = vadd.f32 %v386, %v387
        %398 = vadd.xlane.f32.xlu0 %v397
        %v399 = vpop.xlane.xlu0 %398
        %v400 = vrcp.pop 256.0
        %v401 = vmul.f32 256.0, %v400
        %v402 = vsub.f32 1.0, %v401
        %v403 = vmul.f32 %v400, %v402
        %v404 = vadd.f32 %v400, %v403
        %vm405 = vweird.f32 %v400
        %v406 = vsel %vm405, %v400, %v404
        %v407 = vmul.f32 %v390, %v406
        %v408 = vmul.f32 %v393, %v406
        %v409 = vmul.f32 %v396, %v406
        %v410 = vmul.f32 %v399, %v406
        %v411 = vld [vmem:[%s1] sm:$0xff]
        %v412 = vld [vmem:[%s1 + $0x8] sm:$0xff]
        %v413 = vld [vmem:[%s1 + $0x10] sm:$0xff]
        %v414 = vld [vmem:[%s1 + $0x18] sm:$0xff]
        %v415 = vmul.f32 %v411, %v407
        %v416 = vmul.f32 %v412, %v408
        %v417 = vmul.f32 %v413, %v409
        %v418 = vmul.f32 %v414, %v410
        %vm419 = vcmask 15360
        %v420 = vsel %vm419, %v415, 0.0
        %v421 = vsel %vm419, %v416, 0.0
        %v422 = vadd.f32 %v420, %v421
        %v423 = vsel %vm419, %v417, 0.0
        %v424 = vadd.f32 %v422, %v423
        %v425 = vsel %vm419, %v418, 0.0
        %v426 = vadd.f32 %v424, %v425
        %v427 = vrot.slane %v426, 4
        %v428 = vadd.f32 %v426, %v427
        %v429 = vrot.slane %v428, 2
        %v430 = vadd.f32 %v428, %v429
        %v431 = vrot.slane %v430, 1
        %v432 = vadd.f32 %v430, %v431
        %v433 = vmax.f32 %v432, 0.0
        %v434 = vld [vmem:[%s2] sm:$0xff]
        %v435 = vld [vmem:[%s2 + $0x8] sm:$0xff]
        %v436 = vld [vmem:[%s2 + $0x10] sm:$0xff]
        %v437 = vld [vmem:[%s2 + $0x18] sm:$0xff]
        %v438 = vmul.f32 %v434, %v433
        %v439 = vmul.f32 %v435, %v433
        %v440 = vmul.f32 %v436, %v433
        %v441 = vmul.f32 %v437, %v433
        %v442 = vsel %vm419, %v438, 0.0
        %443 = vadd.xlane.f32.xlu0 %v442
        %v444 = vpop.xlane.xlu0 %443
        %v445 = vsel %vm419, %v439, 0.0
        %446 = vadd.xlane.f32.xlu0 %v445
        %v447 = vpop.xlane.xlu0 %446
        %v448 = vsel %vm419, %v440, 0.0
        %449 = vadd.xlane.f32.xlu0 %v448
        %v450 = vpop.xlane.xlu0 %449
        %v451 = vsel %vm419, %v441, 0.0
        %452 = vadd.xlane.f32.xlu0 %v451
        %v453 = vpop.xlane.xlu0 %452
        %v454 = vadd.f32 %v444, 3.0
        %v455 = vadd.f32 %v447, 3.0
        %v456 = vadd.f32 %v450, 3.0
        %v457 = vadd.f32 %v453, 3.0
        %v458 = vmax.f32 %v454, 0.0
        %v459 = vmax.f32 %v455, 0.0
        %v460 = vmax.f32 %v456, 0.0
        %v461 = vmax.f32 %v457, 0.0
        %v462 = vmin.f32 %v458, 6.0
        %v463 = vmin.f32 %v459, 6.0
        %v464 = vmin.f32 %v460, 6.0
        %v465 = vmin.f32 %v461, 6.0
        %v466 = vmul.f32 %v462, 0.33333334
        %v467 = vmul.f32 %v463, 0.33333334
        %v468 = vmul.f32 %v464, 0.33333334
        %v469 = vmul.f32 %v465, 0.33333334
        %v470 = vld [vmem:[%s3] sm:$0xff]
        %v471 = vld [vmem:[%s3 + $0x8] sm:$0xff]
        %v472 = vld [vmem:[%s4] sm:$0xff]
        %v473 = vld [vmem:[%s4 + $0x8] sm:$0xff]
        %475 = vset.pattern.permute.xlu0 0
        %476 = vperm.xlu0 %475, %v472
        %v477 = vpop.permute.xlu0 %476
        %480 = vset.pattern.permute.xlu0 0
        %481 = vperm.xlu0 %480, %v473
        %v482 = vpop.permute.xlu0 %481
        %vm484 = vcmask 261120
        %v486 = vsel %vm484, %v470, 0
        %v489 = vsel %vm484, %v471, 0
        %491 = vmatpush.msra.mxu0 0.0
        %492 = vmatpush.msra.mxu0 0.0
        %493 = vmatpush.msra.mxu0 0.0
        %494 = vmatpush.msra.mxu0 0.0
        %495 = vmatpush.msra.mxu0 0.0
        %496 = vmatpush.msra.mxu0 0.0
        %497 = vmatpush.msra.mxu0 0.0
        %498 = vmatpush.msra.mxu0 0.0
        %499 = vmatpush.msra.mxu0 0.0
        %500 = vmatpush.msra.mxu0 0.0
        %501 = vmatpush.msra.mxu0 0.0
        %502 = vmatpush.msra.mxu0 0.0
        %503 = vmatpush.msra.mxu0 %v386
        %504 = vmatpush.msra.mxu0 %v384
        %505 = vmatpush.msra.mxu0 %v382
        %506 = vmatpush.msra.mxu0 %v380
        %507 = vmatmul.f32.gmra.mxu0 %v486
        %v508 = vpop.f32.mrf.mxu0
        %v509 = vadd.f32 %v477, %v508
        %510 = vmatmul.f32.gmra.mxu0 %v489
        %v511 = vpop.f32.mrf.mxu0
        %v512 = vadd.f32 %v482, %v511
        %513 = vdwg.mxu0
        %514 = vmatpush.msra.mxu0 0.0
        %515 = vmatpush.msra.mxu0 0.0
        %516 = vmatpush.msra.mxu0 0.0
        %517 = vmatpush.msra.mxu0 0.0
        %518 = vmatpush.msra.mxu0 0.0
        %519 = vmatpush.msra.mxu0 0.0
        %520 = vmatpush.msra.mxu0 0.0
        %521 = vmatpush.msra.mxu0 0.0
        %522 = vmatpush.msra.mxu0 0.0
        %523 = vmatpush.msra.mxu0 0.0
        %524 = vmatpush.msra.mxu0 0.0
        %525 = vmatpush.msra.mxu0 0.0
        %526 = vmatpush.msra.mxu0 %v387
        %527 = vmatpush.msra.mxu0 %v385
        %528 = vmatpush.msra.mxu0 %v383
        %529 = vmatpush.msra.mxu0 %v381
        %530 = vmatmul.f32.gmra.mxu0 %v486
        %v531 = vpop.f32.mrf.mxu0
        %v532 = vadd.f32 %v477, %v531
        %533 = vmatmul.f32.gmra.mxu0 %v489
        %v534 = vpop.f32.mrf.mxu0
        %v535 = vadd.f32 %v482, %v534
        %536 = vdwg.mxu0
        %v537 = vmax.f32 %v509, 0.0
        %v538 = vmax.f32 %v532, 0.0
        %v539 = vmax.f32 %v512, 0.0
        %v540 = vmax.f32 %v535, 0.0
        %541 = vrot.lane.b32.xlu0 %v537, 68
        %v542 = vpop.permute.xlu0 %541
        %543 = vrot.lane.b32.xlu0 %v539, 68
        %v544 = vpop.permute.xlu0 %543
        %545 = vrot.lane.b32.xlu0 %v538, 68
        %v546 = vpop.permute.xlu0 %545
        %547 = vrot.lane.b32.xlu0 %v540, 68
        %v548 = vpop.permute.xlu0 %547
        %v549 = vlaneseq
        %v550 = vand.u32 %v549, 127
        %vm551 = vcmp.lt.s32.totalorder %v550, 68
        %v552 = vsel %vm551, %v542, %v546
        %v553 = vsel %vm551, %v544, %v548
        %v554 = vsel %vm551, %v546, %v542
        %v555 = vsel %vm551, %v548, %v544
        %v556 = vld [vmem:[%s6] sm:$0x3]
        %v558 = vperm.slane %v556, 0
        %v559 = vperm.slane %v556, 1
        %v562 = vmul.f32 %v554, %v558
        %v563 = vmul.f32 %v552, %v559
        %v564 = vmul.f32 %v555, %v558
        %v565 = vmul.f32 %v553, %v559
        %566 = vrot.lane.b32.xlu0 %v537, 64
        %v567 = vpop.permute.xlu0 %566
        %568 = vrot.lane.b32.xlu0 %v539, 64
        %v569 = vpop.permute.xlu0 %568
        %570 = vrot.lane.b32.xlu0 %v538, 64
        %v571 = vpop.permute.xlu0 %570
        %572 = vrot.lane.b32.xlu0 %v540, 64
        %v573 = vpop.permute.xlu0 %572
        %vm574 = vcmp.lt.s32.totalorder %v550, 64
        %v575 = vsel %vm574, %v567, %v571
        %v576 = vsel %vm574, %v569, %v573
        %v577 = vsel %vm574, %v571, %v567
        %v578 = vsel %vm574, %v573, %v569
        %s579 = scalar_lea.vmem %s6, 2
        %v580 = vld [vmem:[%s579] sm:$0x3]
        %v582 = vperm.slane %v580, 0
        %v583 = vperm.slane %v580, 1
        %v586 = vmul.f32 %v577, %v582
        %v587 = vmul.f32 %v575, %v583
        %v588 = vmul.f32 %v578, %v582
        %v589 = vmul.f32 %v576, %v583
        %590 = vrot.lane.b32.xlu0 %v537, 60
        %v591 = vpop.permute.xlu0 %590
        %592 = vrot.lane.b32.xlu0 %v539, 60
        %v593 = vpop.permute.xlu0 %592
        %594 = vrot.lane.b32.xlu0 %v538, 60
        %v595 = vpop.permute.xlu0 %594
        %596 = vrot.lane.b32.xlu0 %v540, 60
        %v597 = vpop.permute.xlu0 %596
        %vm598 = vcmp.lt.s32.totalorder %v550, 60
        %v599 = vsel %vm598, %v591, %v595
        %v600 = vsel %vm598, %v593, %v597
        %v601 = vsel %vm598, %v595, %v591
        %v602 = vsel %vm598, %v597, %v593
        %s603 = scalar_lea.vmem %s6, 4
        %v604 = vld [vmem:[%s603] sm:$0x3]
        %v606 = vperm.slane %v604, 0
        %v607 = vperm.slane %v604, 1
        %v610 = vmul.f32 %v601, %v606
        %v611 = vmul.f32 %v599, %v607
        %v612 = vmul.f32 %v602, %v606
        %v613 = vmul.f32 %v600, %v607
        %614 = vrot.lane.b32.xlu0 %v537, 4
        %v615 = vpop.permute.xlu0 %614
        %616 = vrot.lane.b32.xlu0 %v539, 4
        %v617 = vpop.permute.xlu0 %616
        %618 = vrot.lane.b32.xlu0 %v538, 4
        %v619 = vpop.permute.xlu0 %618
        %620 = vrot.lane.b32.xlu0 %v540, 4
        %v621 = vpop.permute.xlu0 %620
        %vm622 = vcmp.lt.s32.totalorder %v550, 4
        %v623 = vsel %vm622, %v615, %v619
        %v624 = vsel %vm622, %v617, %v621
        %v625 = vsel %vm622, %v619, %v615
        %v626 = vsel %vm622, %v621, %v617
        %s627 = scalar_lea.vmem %s6, 6
        %v628 = vld [vmem:[%s627] sm:$0x3]
        %v630 = vperm.slane %v628, 0
        %v631 = vperm.slane %v628, 1
        %v634 = vmul.f32 %v625, %v630
        %v635 = vmul.f32 %v623, %v631
        %v636 = vmul.f32 %v626, %v630
        %v637 = vmul.f32 %v624, %v631
        %638 = vrot.lane.b32.xlu0 %v537, 124
        %v639 = vpop.permute.xlu0 %638
        %640 = vrot.lane.b32.xlu0 %v539, 124
        %v641 = vpop.permute.xlu0 %640
        %642 = vrot.lane.b32.xlu0 %v538, 124
        %v643 = vpop.permute.xlu0 %642
        %644 = vrot.lane.b32.xlu0 %v540, 124
        %v645 = vpop.permute.xlu0 %644
        %vm646 = vcmp.lt.s32.totalorder %v550, 124
        %v647 = vsel %vm646, %v639, %v643
        %v648 = vsel %vm646, %v641, %v645
        %v649 = vsel %vm646, %v643, %v639
        %v650 = vsel %vm646, %v645, %v641
        %s651 = scalar_lea.vmem %s6, 10
        %v652 = vld [vmem:[%s651] sm:$0x3]
        %v654 = vperm.slane %v652, 0
        %v655 = vperm.slane %v652, 1
        %v658 = vmul.f32 %v647, %v654
        %v659 = vmul.f32 %v649, %v655
        %v660 = vmul.f32 %v648, %v654
        %v661 = vmul.f32 %v650, %v655
        %s662 = scalar_lea.vmem %s6, 12
        %v663 = vld [vmem:[%s662] sm:$0x3]
        %v665 = vperm.slane %v663, 0
        %v666 = vperm.slane %v663, 1
        %v669 = vmul.f32 %v552, %v665
        %v670 = vmul.f32 %v554, %v666
        %v671 = vmul.f32 %v553, %v665
        %v672 = vmul.f32 %v555, %v666
        %s673 = scalar_lea.vmem %s6, 14
        %v674 = vld [vmem:[%s673] sm:$0x3]
        %v676 = vperm.slane %v674, 0
        %v677 = vperm.slane %v674, 1
        %v680 = vmul.f32 %v575, %v676
        %v681 = vmul.f32 %v577, %v677
        %v682 = vmul.f32 %v576, %v676
        %v683 = vmul.f32 %v578, %v677
        %s684 = scalar_lea.vmem %s6, 16
        %v685 = vld [vmem:[%s684] sm:$0x3]
        %v687 = vperm.slane %v685, 0
        %v688 = vperm.slane %v685, 1
        %v691 = vmul.f32 %v599, %v687
        %v692 = vmul.f32 %v601, %v688
        %v693 = vmul.f32 %v600, %v687
        %v694 = vmul.f32 %v602, %v688
        %v695 = vld [vmem:[%s5] sm:$0xff]
        %v696 = vld [vmem:[%s5 + $0x8] sm:$0xff]
        %v697 = vld [vmem:[%s5 + $0x10] sm:$0xff]
        %v698 = vld [vmem:[%s5 + $0x18] sm:$0xff]
        %v699 = vld [vmem:[%s7] sm:$0xff]
        %v700 = vld [vmem:[%s7 + $0x8] sm:$0xff]
        %702 = vset.pattern.permute.xlu0 0
        %703 = vperm.xlu0 %702, %v699
        %v704 = vpop.permute.xlu0 %703
        %707 = vset.pattern.permute.xlu0 0
        %708 = vperm.xlu0 %707, %v700
        %v709 = vpop.permute.xlu0 %708
        %vm711 = vcmask 130048
        %v713 = vsel %vm711, %v696, 0
        %v716 = vsel %vm711, %v698, 0
        %718 = vmatpush.msra.mxu0 %v682
        %719 = vmatpush.msra.mxu0 %v680
        %720 = vmatpush.msra.mxu0 %v671
        %721 = vmatpush.msra.mxu0 %v669
        %722 = vmatpush.msra.mxu0 %v660
        %723 = vmatpush.msra.mxu0 %v658
        %724 = vmatpush.msra.mxu0 %v539
        %725 = vmatpush.msra.mxu0 %v537
        %726 = vmatpush.msra.mxu0 %v636
        %727 = vmatpush.msra.mxu0 %v634
        %728 = vmatpush.msra.mxu0 %v612
        %729 = vmatpush.msra.mxu0 %v610
        %730 = vmatpush.msra.mxu0 %v588
        %731 = vmatpush.msra.mxu0 %v586
        %732 = vmatpush.msra.mxu0 %v564
        %733 = vmatpush.msra.mxu0 %v562
        %734 = vmatmul.f32.gmra.mxu0 %v695
        %v735 = vpop.f32.mrf.mxu0
        %v736 = vadd.f32 %v704, %v735
        %737 = vmatmul.f32.gmra.mxu0 %v697
        %v738 = vpop.f32.mrf.mxu0
        %v739 = vadd.f32 %v709, %v738
        %740 = vdwg.mxu0
        %741 = vmatpush.msra.mxu0 0.0
        %742 = vmatpush.msra.mxu0 0.0
        %743 = vmatpush.msra.mxu0 0.0
        %744 = vmatpush.msra.mxu0 0.0
        %745 = vmatpush.msra.mxu0 0.0
        %746 = vmatpush.msra.mxu0 0.0
        %747 = vmatpush.msra.mxu0 0.0
        %748 = vmatpush.msra.mxu0 0.0
        %749 = vmatpush.msra.mxu0 0.0
        %750 = vmatpush.msra.mxu0 0.0
        %751 = vmatpush.msra.mxu0 0.0
        %752 = vmatpush.msra.mxu0 0.0
        %753 = vmatpush.msra.mxu0 0.0
        %754 = vmatpush.msra.mxu0 0.0
        %755 = vmatpush.msra.mxu0 %v693
        %756 = vmatpush.msra.mxu0 %v691
        %757 = vmatmul.f32.gmra.mxu0 %v713
        %v758 = vpop.f32.mrf.mxu0
        %v759 = vadd.f32 %v736, %v758
        %760 = vmatmul.f32.gmra.mxu0 %v716
        %v761 = vpop.f32.mrf.mxu0
        %v762 = vadd.f32 %v739, %v761
        %763 = vdwg.mxu0
        %764 = vmatpush.msra.mxu0 %v683
        %765 = vmatpush.msra.mxu0 %v681
        %766 = vmatpush.msra.mxu0 %v672
        %767 = vmatpush.msra.mxu0 %v670
        %768 = vmatpush.msra.mxu0 %v661
        %769 = vmatpush.msra.mxu0 %v659
        %770 = vmatpush.msra.mxu0 %v540
        %771 = vmatpush.msra.mxu0 %v538
        %772 = vmatpush.msra.mxu0 %v637
        %773 = vmatpush.msra.mxu0 %v635
        %774 = vmatpush.msra.mxu0 %v613
        %775 = vmatpush.msra.mxu0 %v611
        %776 = vmatpush.msra.mxu0 %v589
        %777 = vmatpush.msra.mxu0 %v587
        %778 = vmatpush.msra.mxu0 %v565
        %779 = vmatpush.msra.mxu0 %v563
        %780 = vmatmul.f32.gmra.mxu0 %v695
        %v781 = vpop.f32.mrf.mxu0
        %v782 = vadd.f32 %v704, %v781
        %783 = vmatmul.f32.gmra.mxu0 %v697
        %v784 = vpop.f32.mrf.mxu0
        %v785 = vadd.f32 %v709, %v784
        %786 = vdwg.mxu0
        %787 = vmatpush.msra.mxu0 0.0
        %788 = vmatpush.msra.mxu0 0.0
        %789 = vmatpush.msra.mxu0 0.0
        %790 = vmatpush.msra.mxu0 0.0
        %791 = vmatpush.msra.mxu0 0.0
        %792 = vmatpush.msra.mxu0 0.0
        %793 = vmatpush.msra.mxu0 0.0
        %794 = vmatpush.msra.mxu0 0.0
        %795 = vmatpush.msra.mxu0 0.0
        %796 = vmatpush.msra.mxu0 0.0
        %797 = vmatpush.msra.mxu0 0.0
        %798 = vmatpush.msra.mxu0 0.0
        %799 = vmatpush.msra.mxu0 0.0
        %800 = vmatpush.msra.mxu0 0.0
        %801 = vmatpush.msra.mxu0 %v694
        %802 = vmatpush.msra.mxu0 %v692
        %803 = vmatmul.f32.gmra.mxu0 %v713
        %v804 = vpop.f32.mrf.mxu0
        %v805 = vadd.f32 %v782, %v804
        %806 = vmatmul.f32.gmra.mxu0 %v716
        %v807 = vpop.f32.mrf.mxu0
        %v808 = vadd.f32 %v785, %v807
        %809 = vdwg.mxu0
        %v810 = vmax.f32 %v759, 0.0
        %v811 = vmax.f32 %v805, 0.0
        %v812 = vmax.f32 %v762, 0.0
        %v813 = vmax.f32 %v808, 0.0
        %v814 = vld [vmem:[%s8] sm:$0xff]
        %v815 = vld [vmem:[%s8 + $0x8] sm:$0xff]
        %v816 = vld [vmem:[%s8 + $0x10] sm:$0xff]
        %v817 = vld [vmem:[%s8 + $0x18] sm:$0xff]
        %v818 = vld [vmem:[%s9] sm:$0xff]
        %v819 = vld [vmem:[%s9 + $0x8] sm:$0xff]
        %v820 = vld [vmem:[%s9 + $0x10] sm:$0xff]
        %v821 = vld [vmem:[%s9 + $0x18] sm:$0xff]
        %823 = vset.pattern.permute.xlu0 0
        %824 = vperm.xlu0 %823, %v818
        %v825 = vpop.permute.xlu0 %824
        %828 = vset.pattern.permute.xlu0 0
        %829 = vperm.xlu0 %828, %v819
        %v830 = vpop.permute.xlu0 %829
        %833 = vset.pattern.permute.xlu0 0
        %834 = vperm.xlu0 %833, %v820
        %v835 = vpop.permute.xlu0 %834
        %838 = vset.pattern.permute.xlu0 0
        %839 = vperm.xlu0 %838, %v821
        %v840 = vpop.permute.xlu0 %839
        %v843 = vsel %vm711, %v814, 0
        %v846 = vsel %vm711, %v815, 0
        %v849 = vsel %vm711, %v816, 0
        %v852 = vsel %vm711, %v817, 0
        %854 = vmatpush.msra.mxu0 0.0
        %855 = vmatpush.msra.mxu0 0.0
        %856 = vmatpush.msra.mxu0 0.0
        %857 = vmatpush.msra.mxu0 0.0
        %858 = vmatpush.msra.mxu0 0.0
        %859 = vmatpush.msra.mxu0 0.0
        %860 = vmatpush.msra.mxu0 0.0
        %861 = vmatpush.msra.mxu0 0.0
        %862 = vmatpush.msra.mxu0 0.0
        %863 = vmatpush.msra.mxu0 0.0
        %864 = vmatpush.msra.mxu0 0.0
        %865 = vmatpush.msra.mxu0 0.0
        %866 = vmatpush.msra.mxu0 0.0
        %867 = vmatpush.msra.mxu0 0.0
        %868 = vmatpush.msra.mxu0 %v812
        %869 = vmatpush.msra.mxu0 %v810
        %870 = vmatmul.f32.gmra.mxu0 %v843
        %v871 = vpop.f32.mrf.mxu0
        %v872 = vadd.f32 %v825, %v871
        %873 = vmatmul.f32.gmra.mxu0 %v846
        %v874 = vpop.f32.mrf.mxu0
        %v875 = vadd.f32 %v830, %v874
        %876 = vmatmul.f32.gmra.mxu0 %v849
        %v877 = vpop.f32.mrf.mxu0
        %v878 = vadd.f32 %v835, %v877
        %879 = vmatmul.f32.gmra.mxu0 %v852
        %v880 = vpop.f32.mrf.mxu0
        %v881 = vadd.f32 %v840, %v880
        %882 = vdwg.mxu0
        %883 = vmatpush.msra.mxu0 0.0
        %884 = vmatpush.msra.mxu0 0.0
        %885 = vmatpush.msra.mxu0 0.0
        %886 = vmatpush.msra.mxu0 0.0
        %887 = vmatpush.msra.mxu0 0.0
        %888 = vmatpush.msra.mxu0 0.0
        %889 = vmatpush.msra.mxu0 0.0
        %890 = vmatpush.msra.mxu0 0.0
        %891 = vmatpush.msra.mxu0 0.0
        %892 = vmatpush.msra.mxu0 0.0
        %893 = vmatpush.msra.mxu0 0.0
        %894 = vmatpush.msra.mxu0 0.0
        %895 = vmatpush.msra.mxu0 0.0
        %896 = vmatpush.msra.mxu0 0.0
        %897 = vmatpush.msra.mxu0 %v813
        %898 = vmatpush.msra.mxu0 %v811
        %899 = vmatmul.f32.gmra.mxu0 %v843
        %v900 = vpop.f32.mrf.mxu0
        %v901 = vadd.f32 %v825, %v900
        %902 = vmatmul.f32.gmra.mxu0 %v846
        %v903 = vpop.f32.mrf.mxu0
        %v904 = vadd.f32 %v830, %v903
        %905 = vmatmul.f32.gmra.mxu0 %v849
        %v906 = vpop.f32.mrf.mxu0
        %v907 = vadd.f32 %v835, %v906
        %908 = vmatmul.f32.gmra.mxu0 %v852
        %v909 = vpop.f32.mrf.mxu0
        %v910 = vadd.f32 %v840, %v909
        %911 = vdwg.mxu0
        %v912 = vmax.f32 %v872, 0.0
        %v913 = vmax.f32 %v901, 0.0
        %v914 = vmax.f32 %v875, 0.0
        %v915 = vmax.f32 %v904, 0.0
        %v916 = vmax.f32 %v878, 0.0
        %v917 = vmax.f32 %v907, 0.0
        %v918 = vmax.f32 %v881, 0.0
        %v919 = vmax.f32 %v910, 0.0
        %v920 = vadd.f32 %v912, 3.0
        %v921 = vadd.f32 %v913, 3.0
        %v922 = vadd.f32 %v914, 3.0
        %v923 = vadd.f32 %v915, 3.0
        %v924 = vadd.f32 %v916, 3.0
        %v925 = vadd.f32 %v917, 3.0
        %v926 = vadd.f32 %v918, 3.0
        %v927 = vadd.f32 %v919, 3.0
        %v928 = vmax.f32 %v920, 0.0
        %v929 = vmax.f32 %v921, 0.0
        %v930 = vmax.f32 %v922, 0.0
        %v931 = vmax.f32 %v923, 0.0
        %v932 = vmax.f32 %v924, 0.0
        %v933 = vmax.f32 %v925, 0.0
        %v934 = vmax.f32 %v926, 0.0
        %v935 = vmax.f32 %v927, 0.0
        %v936 = vmin.f32 %v928, 6.0
        %v937 = vmin.f32 %v929, 6.0
        %v938 = vmin.f32 %v930, 6.0
        %v939 = vmin.f32 %v931, 6.0
        %v940 = vmin.f32 %v932, 6.0
        %v941 = vmin.f32 %v933, 6.0
        %v942 = vmin.f32 %v934, 6.0
        %v943 = vmin.f32 %v935, 6.0
        %v944 = vmul.f32 %v936, 0.33333334
        %v945 = vmul.f32 %v937, 0.33333334
        %v946 = vmul.f32 %v938, 0.33333334
        %v947 = vmul.f32 %v939, 0.33333334
        %v948 = vmul.f32 %v940, 0.33333334
        %v949 = vmul.f32 %v941, 0.33333334
        %v950 = vmul.f32 %v942, 0.33333334
        %v951 = vmul.f32 %v943, 0.33333334
        %v952 = vmul.f32 %v380, %v466
        %v953 = vmul.f32 %v381, %v466
        %v954 = vmul.f32 %v382, %v467
        %v955 = vmul.f32 %v383, %v467
        %v956 = vmul.f32 %v384, %v468
        %v957 = vmul.f32 %v385, %v468
        %v958 = vmul.f32 %v386, %v469
        %v959 = vmul.f32 %v387, %v469
        %v960 = vmul.f32 %v952, %v944
        %v961 = vmul.f32 %v953, %v945
        %v962 = vmul.f32 %v954, %v946
        %v963 = vmul.f32 %v955, %v947
        %v964 = vmul.f32 %v956, %v948
        %v965 = vmul.f32 %v957, %v949
        %v966 = vmul.f32 %v958, %v950
        %v967 = vmul.f32 %v959, %v951
        %968 = vst [vmem:[%s379] sm:$0xff] %v960
        %969 = vst [vmem:[%s379 + $0x8] sm:$0xff] %v961
        %970 = vst [vmem:[%s379 + $0x10] sm:$0xff] %v962
        %971 = vst [vmem:[%s379 + $0x18] sm:$0xff] %v963
        %972 = vst [vmem:[%s379 + $0x20] sm:$0xff] %v964
        %973 = vst [vmem:[%s379 + $0x28] sm:$0xff] %v965
        %974 = vst [vmem:[%s379 + $0x30] sm:$0xff] %v966
        %975 = vst [vmem:[%s379 + $0x38] sm:$0xff] %v967
        %s976 = sand.u32 %s250, 1
        %s977 = scalar_lea.sflag [#allocation4], %s976
        %s978 = sand.u32 %s250, 1
        %s979 = smul.addr %s978, 64
        %s980 = scalar_lea.vmem [#allocation5], %s979
        // Predicated region
        $region65: #{tpu_custom_call.1} parent=59 // pred_check
          %p981 = pneg %p260
        $region66: #{tpu_custom_call.1} parent=59 // pred_check_branch
          %983 = sbr.rel (%p981) target = $region68
        $region67: #{tpu_custom_call.1} parent=59 // pred_region
          %985 = vsyncadd %s977, 0
          %s986 = smul.addr %s27, 8
          %s987 = smul.addr %s986, 8
          %s988 = scalar_lea.hbm %s10, %s987
          %s989 = sshll.u32 %s980, 4
          %s990 = int_to_ptr.vmem [resolvable:$true] %s989
          %s991 = sshll.u32 %s988, 4
          %s992 = int_to_ptr.hbm [resolvable:$true] %s991
          %997 = dma.vmem_to_hbm [thread:$0]  %s990, 1024, %s992, %s977, 256, 256, 16
        $region68: #{tpu_custom_call.1} parent=59 // pred_fallthru
          _
      $region60: #{tpu_custom_call.1} parent=5 // pred_fallthru
        _
      %p998 = scmp.le.s32.totalorder 2, %s22
      // Predicated region
      $region69: #{tpu_custom_call.1} parent=5 // pred_check
        %p999 = pneg %p998
      $region70: #{tpu_custom_call.1} parent=5 // pred_check_branch
        %1001 = sbr.rel (%p999) target = $region72
      $region71: #{tpu_custom_call.1} parent=5 // pred_region
        %s1002 = ssub.s32 %s22, 2
        // Predicated region
        $region73: #{tpu_custom_call.1} parent=71 // pred_check
          %p1003 = pneg %p266
        $region74: #{tpu_custom_call.1} parent=71 // pred_check_branch
          %1005 = sbr.rel (%p1003) target = $region76
        $region75: #{tpu_custom_call.1} parent=71 // pred_region
          %s1006 = sand.u32 %s251, 1
          %s1007 = scalar_lea.sflag [#allocation4], %s1006
          %s1008 = sand.u32 %s251, 1
          %s1009 = smul.addr %s1008, 64
          %s1010 = scalar_lea.vmem [#allocation5], %s1009
          %1012 = dma.done %s1007, 1024
        $region76: #{tpu_custom_call.1} parent=71 // pred_fallthru
          _
      $region72: #{tpu_custom_call.1} parent=5 // pred_fallthru
        _
    $region6: #{tpu_custom_call.1} parent=1 // loop_footer
      %s26 = sadd.s32 1, %s22
    $region7: #{tpu_custom_call.1} parent=1 // loop_footer_branch
      %21 = sbr.rel target = $region3
    $region8: #{tpu_custom_call.1} parent=1 // loop_exit
      _
    %1013 = vsyncpa [#allocation3], 1
    %s1014 = scalar_lea.sflag [#allocation3], 1
    %1015 = vsyncpa %s1014, 1
    %1016 = vsyncpa [#allocation4], 1
    %s1017 = scalar_lea.sflag [#allocation4], 1
    %1018 = vsyncpa %s1017, 1

</llo_original>
